<compile_context>
chip_gen: v7x
topology: tpu7x:2x2x1
jax: 0.10.0
libtpu: 0.0.40
codegen_flags: <defaults>
</compile_context>

<pallas_src>
import jax
import jax.numpy as jnp
from jax.experimental import pallas as pl
from jax.experimental.pallas import tpu as pltpu

NDVI_THRESH = 0.1
VMEM_LIMIT_BYTES = 32 * 1024 * 1024   # explicit scoped-VMEM limit, safe on v5e/v6e/v7x


def _segment_reduce_kernel(img_ref, ndvi_ref, slic_ref, stats_ref):
    """Pass 1: masked per-superpixel channel sums + counts (batch folded into body).

    stats_ref block (1, B*C + B, K_pad) f32 is resident across the inner reduction
    axis: rows [0, B*C) are per-(b, c) masked channel sums, rows [B*C, B*C + B) are
    per-b masked pixel counts.
    """
    inner = pl.program_id(1)

    @pl.when(inner == 0)
    def _():
        stats_ref[...] = jnp.zeros_like(stats_ref)

    b, c, tile = img_ref.shape
    k_pad = stats_ref.shape[2]

    # plant_detector: NDVI threshold. The mask is folded into the matmul LHS
    # (masked channels + a mask row for the counts), so the (K_pad, TILE) membership
    # below depends only on slic and is built ONCE per tile for the whole batch.
    mask = (ndvi_ref[...] > NDVI_THRESH).astype(jnp.float32)          # (B, 1, TILE)
    img_m = img_ref[...] * mask                                       # (B, C, TILE)
    x = jnp.concatenate(
        [img_m.reshape(b * c, tile), mask.reshape(b, tile)], axis=0
    ).astype(jnp.bfloat16)                                            # (B*C + B, TILE)

    slic = slic_ref[0]                                                # (1, TILE) int32
    u_ids = jax.lax.broadcasted_iota(jnp.int32, (k_pad, tile), 0) + 1
    p_tile = (slic == u_ids).astype(jnp.bfloat16)                     # (K_pad, TILE), batch-invariant

    stats_ref[0] += jax.lax.dot_general(
        x, p_tile, (((1,), (1,)), ((), ())),
        preferred_element_type=jnp.float32)                           # (B*C + B, K_pad)


def _scatter_onehot_kernel(lab_ref, ndvi_ref, slic_ref, out_ref):
    """Pass 2: per-pixel label lookup lab[slic-1] (small MXU contraction), NDVI mask
    gating, and the one_hot(weedmap, NUM_OUT) + NCHW permute fused into the store."""
    b = lab_ref.shape[0]
    k_pad = lab_ref.shape[2]
    tile = slic_ref.shape[2]
    n_out = out_ref.shape[1]

    lab = lab_ref[...][:, 0, :].astype(jnp.bfloat16)                  # (B, K_pad), exact in bf16
    slic = slic_ref[0]                                                # (1, TILE)
    u_ids = jax.lax.broadcasted_iota(jnp.int32, (k_pad, tile), 0) + 1
    p_tile = (slic == u_ids).astype(jnp.bfloat16)                     # (K_pad, TILE), batch-invariant

    # exactly one superpixel row matches each pixel, so this is the gather lab[slic-1]
    lab_px = jax.lax.dot_general(lab, p_tile, (((1,), (0,)), ((), ())),
                                 preferred_element_type=jnp.float32)  # (B, TILE)
    lab_i = (lab_px + 0.5).astype(jnp.int32)

    mask = ndvi_ref[...][:, 0, :] > NDVI_THRESH                       # (B, TILE)
    lab_final = jnp.where(mask, lab_i, 0)                             # background -> class 0

    cls_ids = jax.lax.broadcasted_iota(jnp.int32, (b, n_out, tile), 1)
    out_ref[...] = (lab_final[:, None, :] == cls_ids).astype(jnp.float32)


def make_grid_slic(H, W, sp_grid):
    """Deterministic grid 'SLIC' superpixels with ids 1..gh*gw (plain-JAX glue)."""
    gh, gw = sp_grid
    rows = (jnp.arange(H) * gh) // H
    cols = (jnp.arange(W) * gw) // W
    return (rows[:, None] * gw + cols[None, :] + 1).astype(jnp.int32)       # (H, W)


def _pick_tile(hw, k_pad, max_tile=8192, p_budget_bytes=6 << 20):
    """Largest lane-multiple tile such that the bf16 (K_pad, TILE) membership stays
    under budget -- keeps the working set safe on v7x (64 MiB physical / 32 MiB scoped
    VMEM) while still letting big tiles amortize the per-grid-step overhead."""
    cap = min(max_tile, (p_budget_bytes // (k_pad * 2)) // 128 * 128)
    cap = max(cap, 128)
    if hw <= cap:
        return max(128, ((hw + 127) // 128) * 128)
    return cap


def hough_slic_segmentation(image_nchw, ndvi, w_cls, b_cls, sp_grid):
    """image_nchw: (B, C, H, W) f32; ndvi: (B, H, W) f32 -> (B, 3, H, W) one-hot weedmap."""
    B, C, H, W = image_nchw.shape
    HW = H * W
    K = sp_grid[0] * sp_grid[1]
    NCLS = w_cls.shape[1]
    NUM_OUT = max(3, NCLS + 1)            # original module hard-codes one_hot(..., 3)
    K_pad = ((K + 127) // 128) * 128      # lane-dense superpixel axis

    TILE = _pick_tile(HW, K_pad)
    HW_pad = ((HW + TILE - 1) // TILE) * TILE
    n_tiles = HW_pad // TILE
    # split the HW reduction into (outer parallel, inner arbitrary) so both v7x
    # TensorCores have work even at B == 1 (no effect on v5e/v6e, which have 1 TC)
    n_outer = 2 if (n_tiles >= 2 and n_tiles % 2 == 0) else 1
    n_inner = n_tiles // n_outer

    # channel-major, lane-dense layouts (HW last); pad HW up to a tile multiple with
    # slic id 0 (matches nothing) and ndvi below threshold (mask == False)
    img_flat = image_nchw.reshape(B, C, HW).astype(jnp.float32)
    ndvi_flat = ndvi.reshape(B, 1, HW).astype(jnp.float32)
    slic_flat = make_grid_slic(H, W, sp_grid).reshape(1, 1, HW)
    pad = HW_pad - HW
    if pad:
        img_flat = jnp.pad(img_flat, ((0, 0), (0, 0), (0, pad)))
        ndvi_flat = jnp.pad(ndvi_flat, ((0, 0), (0, 0), (0, pad)), constant_values=-2.0)
        slic_flat = jnp.pad(slic_flat, ((0, 0), (0, 0), (0, pad)))

    BC1 = B * C + B

    # ---- pass 1: tiled masked segment reduction -> per-outer partial stats ----
    partial = pl.pallas_call(
        _segment_reduce_kernel,
        out_shape=jax.ShapeDtypeStruct((n_outer, BC1, K_pad), jnp.float32),
        grid=(n_outer, n_inner),
        in_specs=[
            pl.BlockSpec((B, C, TILE), lambda o, i: (0, 0, o * n_inner + i)),
            pl.BlockSpec((B, 1, TILE), lambda o, i: (0, 0, o * n_inner + i)),
            pl.BlockSpec((1, 1, TILE), lambda o, i: (0, 0, o * n_inner + i)),
        ],
        out_specs=pl.BlockSpec((1, BC1, K_pad), lambda o, i: (o, 0, 0)),
        compiler_params=pltpu.CompilerParams(
            dimension_semantics=("parallel", "arbitrary"),
            vmem_limit_bytes=VMEM_LIMIT_BYTES),
    )(img_flat, ndvi_flat, slic_flat)

    # ---- tiny epilogue (plain XLA): combine partials + linear-head labels ----
    stats = partial.sum(axis=0)                                   # (B*C + B, K_pad)
    feats_sum = stats[:B * C].reshape(B, C, K_pad)
    counts = stats[B * C:].reshape(B, 1, K_pad)
    feats = feats_sum / jnp.maximum(counts, 1.0)                  # exact division
    w_f = w_cls.astype(jnp.float32)
    b_f = b_cls.reshape(1, NCLS, 1).astype(jnp.float32)
    logits = jnp.einsum('cn,bck->bnk', w_f, feats) + b_f          # (B, NCLS, K_pad)
    lab = (jnp.argmax(logits, axis=1) + 1).astype(jnp.float32)    # labels 1..NCLS
    lab = lab.reshape(B, 1, K_pad)

    # ---- pass 2: per-pixel scatter with fused one-hot NCHW output ----
    onehot = pl.pallas_call(
        _scatter_onehot_kernel,
        out_shape=jax.ShapeDtypeStruct((B, NUM_OUT, HW_pad), jnp.float32),
        grid=(n_tiles,),
        in_specs=[
            pl.BlockSpec((B, 1, K_pad), lambda t: (0, 0, 0)),
            pl.BlockSpec((B, 1, TILE), lambda t: (0, 0, t)),
            pl.BlockSpec((1, 1, TILE), lambda t: (0, 0, t)),
        ],
        out_specs=pl.BlockSpec((B, NUM_OUT, TILE), lambda t: (0, 0, t)),
        compiler_params=pltpu.CompilerParams(
            dimension_semantics=("parallel",),
            vmem_limit_bytes=VMEM_LIMIT_BYTES),
    )(lab, ndvi_flat, slic_flat)

    return onehot[:, :, :HW].reshape(B, NUM_OUT, H, W)


if __name__ == "__main__":
    key = jax.random.PRNGKey(0)
    B, C, H, W = 2, 4, 16, 16          # small NCHW input (RGB + NIR style)
    NCLS = 2                           # classifier labels {1, 2}; weedmap has 3 classes
    SP_GRID = (4, 4)                   # 16 synthetic superpixels per image

    k1, k2, k3, k4 = jax.random.split(key, 4)
    image = jax.random.uniform(k1, (B, C, H, W), jnp.float32)
    ndvi = jax.random.uniform(k2, (B, H, W), jnp.float32, minval=-1.0, maxval=1.0)
    w_cls = jax.random.normal(k3, (C, NCLS), jnp.float32) * 0.5
    b_cls = jax.random.normal(k4, (1, NCLS), jnp.float32) * 0.1

    out = hough_slic_segmentation(image, ndvi, w_cls, b_cls, SP_GRID)
    out = jax.block_until_ready(out)

    assert out.shape == (B, 3, H, W), out.shape
    # valid one-hot weedmap: the 3 class channels sum to 1 at every pixel
    assert bool(jnp.allclose(out.sum(axis=1), 1.0))
    print("KERNEL_OK")
</pallas_src>

<mosaic_0001>
module attributes {stable_mosaic.version = 11 : i64} {
  func.func @_segment_reduce_kernel(%arg0: i32, %arg1: i32, %arg2: memref<2x4x256xf32, #tpu.memory_space<vmem>>, %arg3: memref<2x1x256xf32, #tpu.memory_space<vmem>>, %arg4: memref<1x1x256xi32, #tpu.memory_space<vmem>>, %arg5: memref<1x10x128xf32, #tpu.memory_space<vmem>>) attributes {dimension_semantics = [#tpu.dimension_semantics<parallel>, #tpu.dimension_semantics<arbitrary>], iteration_bounds = array<i64: 1, 1>, scalar_prefetch = 0 : i64, scratch_operands = 0 : i64, tpu.core_type = #tpu.core_type<tc>, window_params = [{transform_indices = @transform_0, window_bounds = array<i64: 2, 4, 256>}, {transform_indices = @transform_1, window_bounds = array<i64: 2, 1, 256>}, {transform_indices = @transform_2, window_bounds = array<i64: 1, 1, 256>}, {transform_indices = @transform_3, window_bounds = array<i64: 1, 10, 128>}]} {
    %c0_i32 = arith.constant 0 : i32
    %0 = arith.cmpi eq, %arg1, %c0_i32 : i32
    %1 = arith.extui %0 : i1 to i32
    %c0_i32_0 = arith.constant 0 : i32
    %2 = arith.cmpi ne, %1, %c0_i32_0 : i32
    scf.if %2 {
      %cst_16 = arith.constant 0.000000e+00 : f32
      %32 = vector.broadcast %cst_16 : f32 to vector<1x10x128xf32>
      %c0_17 = arith.constant 0 : index
      %c0_18 = arith.constant 0 : index
      %c0_19 = arith.constant 0 : index
      %33 = vector.load %arg5[%c0_17, %c0_18, %c0_19] : memref<1x10x128xf32, #tpu.memory_space<vmem>>, vector<1x10x128xf32>
      tpu.vector_store %arg5[%c0_17, %c0_18, %c0_19], %32 {strides = array<i32>} : memref<1x10x128xf32, #tpu.memory_space<vmem>>, vector<1x10x128xf32>,
    } else {
    }
    %c0 = arith.constant 0 : index
    %c0_1 = arith.constant 0 : index
    %c0_2 = arith.constant 0 : index
    %3 = vector.load %arg3[%c0, %c0_1, %c0_2] : memref<2x1x256xf32, #tpu.memory_space<vmem>>, vector<2x1x256xf32>
    %cst = arith.constant 1.000000e-01 : f32
    %4 = vector.broadcast %cst : f32 to vector<2x1x256xf32>
    %5 = arith.cmpf ogt, %3, %4 : vector<2x1x256xf32>
    %6 = arith.extui %5 : vector<2x1x256xi1> to vector<2x1x256xi32>
    %7 = arith.sitofp %6 : vector<2x1x256xi32> to vector<2x1x256xf32>
    %c0_3 = arith.constant 0 : index
    %c0_4 = arith.constant 0 : index
    %c0_5 = arith.constant 0 : index
    %8 = vector.load %arg2[%c0_3, %c0_4, %c0_5] : memref<2x4x256xf32, #tpu.memory_space<vmem>>, vector<2x4x256xf32>
    %9 = vector.broadcast %7 : vector<2x1x256xf32> to vector<2x4x256xf32>
    %10 = arith.mulf %8, %9 : vector<2x4x256xf32>
    %11 = vector.shape_cast %10 : vector<2x4x256xf32> to vector<8x256xf32>
    %12 = vector.shape_cast %7 : vector<2x1x256xf32> to vector<2x256xf32>
    %13 = tpu.concatenate %11, %12 in 0 : vector<8x256xf32>, vector<2x256xf32> -> vector<10x256xf32>
    %14 = arith.truncf %13 : vector<10x256xf32> to vector<10x256xbf16>
    %c0_6 = arith.constant 0 : index
    %c0_7 = arith.constant 0 : index
    %c0_8 = arith.constant 0 : index
    %15 = vector.load %arg4[%c0_6, %c0_7, %c0_8] : memref<1x1x256xi32, #tpu.memory_space<vmem>>, vector<1x1x256xi32>
    %16 = vector.shape_cast %15 : vector<1x1x256xi32> to vector<1x256xi32>
    %17 = tpu.iota {dimensions = array<i32: 0>} : vector<128x256xi32>
    %c1_i32 = arith.constant 1 : i32
    %18 = vector.broadcast %c1_i32 : i32 to vector<128x256xi32>
    %19 = arith.addi %17, %18 : vector<128x256xi32>
    %20 = vector.broadcast %16 : vector<1x256xi32> to vector<128x256xi32>
    %21 = arith.cmpi eq, %20, %19 : vector<128x256xi32>
    %22 = arith.extui %21 : vector<128x256xi1> to vector<128x256xi32>
    %23 = arith.sitofp %22 : vector<128x256xi32> to vector<128x256xf32>
    %24 = arith.truncf %23 : vector<128x256xf32> to vector<128x256xbf16>
    %c0_9 = arith.constant 0 : index
    %c0_10 = arith.constant 0 : index
    %c0_11 = arith.constant 0 : index
    %25 = vector.load %arg5[%c0_9, %c0_10, %c0_11] : memref<1x10x128xf32, #tpu.memory_space<vmem>>, vector<1x10x128xf32>
    %26 = vector.shape_cast %25 : vector<1x10x128xf32> to vector<10x128xf32>
    %cst_12 = arith.constant dense<0.000000e+00> : vector<10x128xf32>
    %27 = tpu.matmul %14, %24, %cst_12 {dimension_numbers = #tpu.dot_dimension_numbers<[1], [1], [0], [0], [0, 0, 1, 0], [], []>} : vector<10x256xbf16>, vector<128x256xbf16>, vector<10x128xf32> -> vector<10x128xf32>
    %28 = arith.addf %26, %27 : vector<10x128xf32>
    %c0_13 = arith.constant 0 : index
    %c0_14 = arith.constant 0 : index
    %c0_15 = arith.constant 0 : index
    %29 = vector.load %arg5[%c0_13, %c0_14, %c0_15] : memref<1x10x128xf32, #tpu.memory_space<vmem>>, vector<1x10x128xf32>
    %30 = vector.shape_cast %29 : vector<1x10x128xf32> to vector<10x128xf32>
    %31 = vector.shape_cast %28 : vector<10x128xf32> to vector<1x10x128xf32>
    tpu.vector_store %arg5[%c0_13, %c0_14, %c0_15], %31 {strides = array<i32>} : memref<1x10x128xf32, #tpu.memory_space<vmem>>, vector<1x10x128xf32>,
    return
  }
  func.func @transform_0(%arg0: i32, %arg1: i32) -> (i32, i32, i32) {
    %c1_i32 = arith.constant 1 : i32
    %0 = arith.muli %arg0, %c1_i32 : i32
    %1 = arith.addi %0, %arg1 : i32
    %c0_i32 = arith.constant 0 : i32
    %c0_i32_0 = arith.constant 0 : i32
    %c0_i32_1 = arith.constant 0 : i32
    return %c0_i32, %c0_i32_0, %1 : i32, i32, i32
  }
  func.func @transform_1(%arg0: i32, %arg1: i32) -> (i32, i32, i32) {
    %c1_i32 = arith.constant 1 : i32
    %0 = arith.muli %arg0, %c1_i32 : i32
    %1 = arith.addi %0, %arg1 : i32
    %c0_i32 = arith.constant 0 : i32
    %c0_i32_0 = arith.constant 0 : i32
    %c0_i32_1 = arith.constant 0 : i32
    return %c0_i32, %c0_i32_0, %1 : i32, i32, i32
  }
  func.func @transform_2(%arg0: i32, %arg1: i32) -> (i32, i32, i32) {
    %c1_i32 = arith.constant 1 : i32
    %0 = arith.muli %arg0, %c1_i32 : i32
    %1 = arith.addi %0, %arg1 : i32
    %c0_i32 = arith.constant 0 : i32
    %c0_i32_0 = arith.constant 0 : i32
    %c0_i32_1 = arith.constant 0 : i32
    return %c0_i32, %c0_i32_0, %1 : i32, i32, i32
  }
  func.func @transform_3(%arg0: i32, %arg1: i32) -> (i32, i32, i32) {
    %c0_i32 = arith.constant 0 : i32
    %c0_i32_0 = arith.constant 0 : i32
    %c0_i32_1 = arith.constant 0 : i32
    return %arg0, %c0_i32, %c0_i32_0 : i32, i32, i32
  }
}

</mosaic_0001>

<llo_original>
// kernel: tpu_custom_call.1
$region0: #{tpu_custom_call.1}
  #allocation0 [shape = 'u32[]', space=smem, size = 0x4, offset = 0x4, fixed_abs, tag = 'smem constant byte address 0x4 - core index']
  #allocation1 [shape = 'u32[144,128]{1,0:T(1,128)}', space=vmem, size = 0x12000, scoped, tag = 'internal scratch']
  %s0 = inlined_call_operand.hbm [shape: f32[2,4,256], index: 0, kind: input, shape index: {}]
  %s1 = inlined_call_operand.hbm [shape: f32[2,1,256], index: 1, kind: input, shape index: {}]
  %s2 = inlined_call_operand.vmem [shape: s32[1,1,256], index: 2, kind: input, shape index: {}]
  %s3 = inlined_call_operand.vmem [shape: f32[1,10,128], index: 3, kind: output, shape index: {}]
  %s4 = sld [smem:[#allocation0]]
  $region34: #{tpu_custom_call.1} parent=0
    _
  %s6 = ssub.s32 1, %s4
  %s7 = scalar_select 0, %s6, %s4
  $region1: #{tpu_custom_call.1} parent=0
    #allocation2 [shape = 'u8[8192]{0}', space=vmem, size = 0x2000, scoped, tag = 'input window, operand 0, single buffered']
    #allocation3 [shape = 's32[1]{0}', space=sflag, size = 0x4, scoped, tag = 'scoped memory for tpu_custom_call.1']
    #allocation4 [shape = 'u8[2048]{0}', space=vmem, size = 0x800, scoped, tag = 'input window, operand 1, single buffered']
    #allocation5 [shape = 's32[1]{0}', space=sflag, size = 0x4, scoped, tag = 'scoped memory for tpu_custom_call.1']
    %8 = vsyncpa [#allocation3], 0
    %9 = vsyncpa [#allocation5], 0
    // Predicated region
    $region2: #{tpu_custom_call.1} parent=1 // pred_check
      _
    $region3: #{tpu_custom_call.1} parent=1 // pred_check_branch
      %11 = sbr.rel (0) target = $region5
    $region4: #{tpu_custom_call.1} parent=1 // pred_region
      %s12 = sadd.s32 0, 0
      %s13 = smul.u32 2, %s12
      %s15 = ssub.s32 256, 256
      %16 = vsyncadd [#allocation3], %s15
      %s17 = smul.addr %s13, 64
      %s18 = scalar_lea.hbm %s0, %s17
      %s19 = sshll.u32 [#allocation2], 4
      %s20 = int_to_ptr.vmem [resolvable:$true] %s19
      %25 = dma.hbm_to_vmem [thread:$0]  %s18, 256, %s20, [#allocation3], 128, 128, 8
    $region5: #{tpu_custom_call.1} parent=1 // pred_fallthru
      _
    // Predicated region
    $region6: #{tpu_custom_call.1} parent=1 // pred_check
      _
    $region7: #{tpu_custom_call.1} parent=1 // pred_check_branch
      %27 = sbr.rel (0) target = $region9
    $region8: #{tpu_custom_call.1} parent=1 // pred_region
      %s28 = sadd.s32 0, 0
      %s29 = smul.u32 2, %s28
      %s31 = ssub.s32 64, 64
      %32 = vsyncadd [#allocation5], %s31
      %s33 = smul.addr %s29, 16
      %s34 = scalar_lea.hbm %s1, %s33
      %s35 = sshll.u32 [#allocation4], 4
      %s36 = int_to_ptr.vmem [resolvable:$true] %s35
      %41 = dma.hbm_to_vmem [thread:$0]  %s34, 64, %s36, [#allocation5], 32, 32, 2
    $region9: #{tpu_custom_call.1} parent=1 // pred_fallthru
      _
    // Predicated region
    $region10: #{tpu_custom_call.1} parent=1 // pred_check
      _
    $region11: #{tpu_custom_call.1} parent=1 // pred_check_branch
      %43 = sbr.rel (0) target = $region13
    $region12: #{tpu_custom_call.1} parent=1 // pred_region
      %s44 = sadd.s32 0, 0
      %s45 = smul.u32 2, %s44
      %p46 = scmp.lt.s32.totalorder %s45, 1
      %s47 = scalar_select %p46, %s45, 1
      %s48 = scalar_lea.vmem %s2, %s47
      %s49 = sadd.s32 0, 0
      %s50 = smul.u32 2, %s49
    $region13: #{tpu_custom_call.1} parent=1 // pred_fallthru
      _
    // Predicated region
    $region14: #{tpu_custom_call.1} parent=1 // pred_check
      _
    $region15: #{tpu_custom_call.1} parent=1 // pred_check_branch
      %52 = sbr.rel (0) target = $region17
    $region16: #{tpu_custom_call.1} parent=1 // pred_region
      %53 = dma.done [#allocation3], 256
    $region17: #{tpu_custom_call.1} parent=1 // pred_fallthru
      _
    // Predicated region
    $region18: #{tpu_custom_call.1} parent=1 // pred_check
      _
    $region19: #{tpu_custom_call.1} parent=1 // pred_check_branch
      %55 = sbr.rel (0) target = $region21
    $region20: #{tpu_custom_call.1} parent=1 // pred_region
      %56 = dma.done [#allocation5], 64
    $region21: #{tpu_custom_call.1} parent=1 // pred_fallthru
      _
    %s57 = sadd.s32 0, 0
    %s58 = smul.u32 2, %s57
    %p59 = scmp.lt.s32.totalorder %s58, 1
    %s60 = scalar_select %p59, %s58, 1
    %s61 = scalar_lea.vmem %s2, %s60
    %s62 = sadd.s32 0, 0
    %s63 = smul.u32 2, %s62
    %s64 = sadd.s32 0, 0
    %s65 = smul.u32 2, %s64
    %s66 = sadd.s32 0, 0
    %s67 = smul.u32 2, %s66
    %p68 = scmp.lt.s32.totalorder %s67, 1
    %s69 = scalar_select %p68, %s67, 1
    %s70 = scalar_lea.vmem %s2, %s69
    %s71 = sadd.s32 0, 0
    %s72 = smul.u32 2, %s71
    %p74 = scmp.eq.s32.totalorder 0, 0
    // Predicated region
    $region22: #{tpu_custom_call.1} parent=1 // pred_check
      %p75 = pneg %p74
    $region23: #{tpu_custom_call.1} parent=1 // pred_check_branch
      %77 = sbr.rel (%p75) target = $region25
    $region24: #{tpu_custom_call.1} parent=1 // pred_region
      %78 = vst [vmem:[%s3] sm:$0xff] 0.0
      %79 = vst [vmem:[%s3 + $0x8] sm:$0x3] 0.0
    $region25: #{tpu_custom_call.1} parent=1 // pred_fallthru
      _
    %v80 = vld [vmem:[#allocation4] sm:$0x3]
    %v81 = vld [vmem:[#allocation4 + $0x2] sm:$0x3]
    %vm82 = vcmp.gt.f32.partialorder %v80, 0.1
    %vm83 = vcmp.gt.f32.partialorder %v81, 0.1
    %v84 = vsel %vm82, 1, 0
    %v85 = vsel %vm83, 1, 0
    %v86 = vcvt.s32.f32 %v84
    %v87 = vcvt.s32.f32 %v85
    %v88 = vld [vmem:[#allocation2] sm:$0xff]
    %v89 = vld [vmem:[#allocation2 + $0x8] sm:$0xff]
    %v92 = vlaneseq
    %v93 = vshrl.u32 %v92, 7
    %v94 = vsub.s32 0, %v93
    %v95 = vrot.slane %v86, %v94
    %v96 = vlaneseq
    %v97 = vshrl.u32 %v96, 7
    %v98 = vsub.s32 1, %v97
    %v99 = vrot.slane %v86, %v98
    %v100 = vlaneseq
    %v101 = vshrl.u32 %v100, 7
    %v102 = vsub.s32 0, %v101
    %v103 = vrot.slane %v87, %v102
    %v104 = vlaneseq
    %v105 = vshrl.u32 %v104, 7
    %v106 = vsub.s32 1, %v105
    %v107 = vrot.slane %v87, %v106
    %v108 = vcombine.low %v95, %v99
    %v109 = vcombine.low %v103, %v107
    %v112 = vmul.f32 %v88, %v108
    %v113 = vmul.f32 %v89, %v109
    %v116 = vcombine.low %v112, %v113
    %v117 = vcombine.high %v112, %v113
    %v120 = vcombine.low %v86, %v87
    %v122 = vunpack.c.l.s4 1966171168
    %v123 = vunpack.c.0.s8 %v122
    %v124 = vlaneseq
    %v125 = vshrl.u32 %v124, 7
    %v126 = vsub.s32 %v123, %v125
    %v127 = vrot.slane %v120, %v126
    %v128 = vcombine.high %v127, %v127
    %v130 = vunpack.c.l.s4 1966171168
    %v131 = vunpack.c.0.s8 %v130
    %v132 = vlaneseq
    %v133 = vshrl.u32 %v132, 7
    %v134 = vsub.s32 %v131, %v133
    %v135 = vrot.slane %v127, %v134
    %v137 = vunpack.c.l.s4 1966171168
    %v138 = vunpack.c.0.s8 %v137
    %v139 = vlaneseq
    %v140 = vshrl.u32 %v139, 7
    %v141 = vsub.s32 %v138, %v140
    %v142 = vrot.slane %v128, %v141
    %v145 = vpack.c.bf16 %v135, %v116
    %v146 = vpack.c.bf16 %v142, %v117
    %v147 = vld [vmem:[%s70] sm:$0x3]
    %v148 = vlaneseq
    %v149 = vshrl.u32 %v148, 7
    %v150 = vadd.s32 %v149, 8
    %v151 = vadd.s32 %v149, 16
    %v152 = vadd.s32 %v149, 24
    %v153 = vadd.s32 %v149, 32
    %v154 = vadd.s32 %v149, 40
    %v155 = vadd.s32 %v149, 48
    %v156 = vadd.s32 %v149, 56
    %v157 = vadd.s32 %v149, 64
    %v158 = vadd.s32 %v149, 72
    %v159 = vadd.s32 %v149, 80
    %v160 = vadd.s32 %v149, 88
    %v161 = vadd.s32 %v149, 96
    %v162 = vadd.s32 %v149, 104
    %v163 = vadd.s32 %v149, 112
    %v164 = vadd.s32 %v149, 120
    %v165 = vadd.s32 %v149, 1
    %v166 = vadd.s32 %v150, 1
    %v167 = vadd.s32 %v151, 1
    %v168 = vadd.s32 %v152, 1
    %v169 = vadd.s32 %v153, 1
    %v170 = vadd.s32 %v154, 1
    %v171 = vadd.s32 %v155, 1
    %v172 = vadd.s32 %v156, 1
    %v173 = vadd.s32 %v157, 1
    %v174 = vadd.s32 %v158, 1
    %v175 = vadd.s32 %v159, 1
    %v176 = vadd.s32 %v160, 1
    %v177 = vadd.s32 %v161, 1
    %v178 = vadd.s32 %v162, 1
    %v179 = vadd.s32 %v163, 1
    %v180 = vadd.s32 %v164, 1
    %v181 = vlaneseq
    %v182 = vshrl.u32 %v181, 7
    %v183 = vsub.s32 0, %v182
    %v184 = vrot.slane %v147, %v183
    %v185 = vlaneseq
    %v186 = vshrl.u32 %v185, 7
    %v187 = vsub.s32 1, %v186
    %v188 = vrot.slane %v147, %v187
    %vm189 = vcmp.eq.s32.totalorder %v184, %v165
    %vm190 = vcmp.eq.s32.totalorder %v188, %v165
    %vm191 = vcmp.eq.s32.totalorder %v184, %v166
    %vm192 = vcmp.eq.s32.totalorder %v188, %v166
    %vm193 = vcmp.eq.s32.totalorder %v184, %v167
    %vm194 = vcmp.eq.s32.totalorder %v188, %v167
    %vm195 = vcmp.eq.s32.totalorder %v184, %v168
    %vm196 = vcmp.eq.s32.totalorder %v188, %v168
    %vm197 = vcmp.eq.s32.totalorder %v184, %v169
    %vm198 = vcmp.eq.s32.totalorder %v188, %v169
    %vm199 = vcmp.eq.s32.totalorder %v184, %v170
    %vm200 = vcmp.eq.s32.totalorder %v188, %v170
    %vm201 = vcmp.eq.s32.totalorder %v184, %v171
    %vm202 = vcmp.eq.s32.totalorder %v188, %v171
    %vm203 = vcmp.eq.s32.totalorder %v184, %v172
    %vm204 = vcmp.eq.s32.totalorder %v188, %v172
    %vm205 = vcmp.eq.s32.totalorder %v184, %v173
    %vm206 = vcmp.eq.s32.totalorder %v188, %v173
    %vm207 = vcmp.eq.s32.totalorder %v184, %v174
    %vm208 = vcmp.eq.s32.totalorder %v188, %v174
    %vm209 = vcmp.eq.s32.totalorder %v184, %v175
    %vm210 = vcmp.eq.s32.totalorder %v188, %v175
    %vm211 = vcmp.eq.s32.totalorder %v184, %v176
    %vm212 = vcmp.eq.s32.totalorder %v188, %v176
    %vm213 = vcmp.eq.s32.totalorder %v184, %v177
    %vm214 = vcmp.eq.s32.totalorder %v188, %v177
    %vm215 = vcmp.eq.s32.totalorder %v184, %v178
    %vm216 = vcmp.eq.s32.totalorder %v188, %v178
    %vm217 = vcmp.eq.s32.totalorder %v184, %v179
    %vm218 = vcmp.eq.s32.totalorder %v188, %v179
    %vm219 = vcmp.eq.s32.totalorder %v184, %v180
    %vm220 = vcmp.eq.s32.totalorder %v188, %v180
    %v221 = vsel %vm189, 1, 0
    %v222 = vsel %vm190, 1, 0
    %v223 = vsel %vm191, 1, 0
    %v224 = vsel %vm192, 1, 0
    %v225 = vsel %vm193, 1, 0
    %v226 = vsel %vm194, 1, 0
    %v227 = vsel %vm195, 1, 0
    %v228 = vsel %vm196, 1, 0
    %v229 = vsel %vm197, 1, 0
    %v230 = vsel %vm198, 1, 0
    %v231 = vsel %vm199, 1, 0
    %v232 = vsel %vm200, 1, 0
    %v233 = vsel %vm201, 1, 0
    %v234 = vsel %vm202, 1, 0
    %v235 = vsel %vm203, 1, 0
    %v236 = vsel %vm204, 1, 0
    %v237 = vsel %vm205, 1, 0
    %v238 = vsel %vm206, 1, 0
    %v239 = vsel %vm207, 1, 0
    %v240 = vsel %vm208, 1, 0
    %v241 = vsel %vm209, 1, 0
    %v242 = vsel %vm210, 1, 0
    %v243 = vsel %vm211, 1, 0
    %v244 = vsel %vm212, 1, 0
    %v245 = vsel %vm213, 1, 0
    %v246 = vsel %vm214, 1, 0
    %v247 = vsel %vm215, 1, 0
    %v248 = vsel %vm216, 1, 0
    %v249 = vsel %vm217, 1, 0
    %v250 = vsel %vm218, 1, 0
    %v251 = vsel %vm219, 1, 0
    %v252 = vsel %vm220, 1, 0
    %v253 = vcvt.s32.f32 %v221
    %v254 = vcvt.s32.f32 %v222
    %v255 = vcvt.s32.f32 %v223
    %v256 = vcvt.s32.f32 %v224
    %v257 = vcvt.s32.f32 %v225
    %v258 = vcvt.s32.f32 %v226
    %v259 = vcvt.s32.f32 %v227
    %v260 = vcvt.s32.f32 %v228
    %v261 = vcvt.s32.f32 %v229
    %v262 = vcvt.s32.f32 %v230
    %v263 = vcvt.s32.f32 %v231
    %v264 = vcvt.s32.f32 %v232
    %v265 = vcvt.s32.f32 %v233
    %v266 = vcvt.s32.f32 %v234
    %v267 = vcvt.s32.f32 %v235
    %v268 = vcvt.s32.f32 %v236
    %v269 = vcvt.s32.f32 %v237
    %v270 = vcvt.s32.f32 %v238
    %v271 = vcvt.s32.f32 %v239
    %v272 = vcvt.s32.f32 %v240
    %v273 = vcvt.s32.f32 %v241
    %v274 = vcvt.s32.f32 %v242
    %v275 = vcvt.s32.f32 %v243
    %v276 = vcvt.s32.f32 %v244
    %v277 = vcvt.s32.f32 %v245
    %v278 = vcvt.s32.f32 %v246
    %v279 = vcvt.s32.f32 %v247
    %v280 = vcvt.s32.f32 %v248
    %v281 = vcvt.s32.f32 %v249
    %v282 = vcvt.s32.f32 %v250
    %v283 = vcvt.s32.f32 %v251
    %v284 = vcvt.s32.f32 %v252
    %v285 = vpack.c.bf16 %v255, %v253
    %v286 = vpack.c.bf16 %v256, %v254
    %v287 = vpack.c.bf16 %v259, %v257
    %v288 = vpack.c.bf16 %v260, %v258
    %v289 = vpack.c.bf16 %v263, %v261
    %v290 = vpack.c.bf16 %v264, %v262
    %v291 = vpack.c.bf16 %v267, %v265
    %v292 = vpack.c.bf16 %v268, %v266
    %v293 = vpack.c.bf16 %v271, %v269
    %v294 = vpack.c.bf16 %v272, %v270
    %v295 = vpack.c.bf16 %v275, %v273
    %v296 = vpack.c.bf16 %v276, %v274
    %v297 = vpack.c.bf16 %v279, %v277
    %v298 = vpack.c.bf16 %v280, %v278
    %v299 = vpack.c.bf16 %v283, %v281
    %v300 = vpack.c.bf16 %v284, %v282
    %v301 = vld [vmem:[%s3] sm:$0xff]
    %v302 = vld [vmem:[%s3 + $0x8] sm:$0x3]
    %303 = vmatprep.subr.bf16.mxu0 %v286
    %304 = vmatpush1.bf16.xpose.msra.mxu0 %v285
    %305 = vmatprep.subr.bf16.mxu0 %v288
    %306 = vmatpush1.bf16.xpose.msra.mxu0 %v287
    %307 = vmatprep.subr.bf16.mxu0 %v290
    %308 = vmatpush1.bf16.xpose.msra.mxu0 %v289
    %309 = vmatprep.subr.bf16.mxu0 %v292
    %310 = vmatpush1.bf16.xpose.msra.mxu0 %v291
    %311 = vmatprep.subr.bf16.mxu0 %v294
    %312 = vmatpush1.bf16.xpose.msra.mxu0 %v293
    %313 = vmatprep.subr.bf16.mxu0 %v296
    %314 = vmatpush1.bf16.xpose.msra.mxu0 %v295
    %315 = vmatprep.subr.bf16.mxu0 %v298
    %316 = vmatpush1.bf16.xpose.msra.mxu0 %v297
    %317 = vmatprep.subr.bf16.mxu0 %v300
    %318 = vmatpush1.bf16.xpose.msra.mxu0 %v299
    %319 = vmatprep.subr.bf16.mxu0 0
    %320 = vmatpush1.bf16.xpose.msra.mxu0 0
    %321 = vmatprep.subr.bf16.mxu0 0
    %322 = vmatpush1.bf16.xpose.msra.mxu0 0
    %323 = vmatprep.subr.bf16.mxu0 0
    %324 = vmatpush1.bf16.xpose.msra.mxu0 0
    %325 = vmatprep.subr.bf16.mxu0 0
    %326 = vmatpush1.bf16.xpose.msra.mxu0 0
    %327 = vmatprep.subr.bf16.mxu0 0
    %328 = vmatpush1.bf16.xpose.msra.mxu0 0
    %329 = vmatprep.subr.bf16.mxu0 0
    %330 = vmatpush1.bf16.xpose.msra.mxu0 0
    %331 = vmatprep.subr.bf16.mxu0 0
    %332 = vmatpush1.bf16.xpose.msra.mxu0 0
    %333 = vmatprep.subr.bf16.mxu0 0
    %334 = vmatpush1.bf16.xpose.msra.mxu0 0
    %335 = vmatprep.mubr.bf16.mxu0 %v146
    %336 = vmatmul.mubr.bf16.gmra.mrb[0].mxu0 %v145
    %v337 = vpop.f32.mrb[0].mxu0
    %v338 = vadd.f32 0.0, %v337
    %v339 = vpop.f32.mrb[0].mxu0
    %v340 = vpop.f32.mrb[0].mxu0
    %v341 = vadd.f32 0.0, %v340
    %v342 = vpop.f32.mrb[0].mxu0
    %343 = vdwg.mxu0
    %v344 = vadd.f32 %v301, %v338
    %v345 = vadd.f32 %v302, %v341
    %346 = vst [vmem:[%s3] sm:$0xff] %v344
    %347 = vst [vmem:[%s3 + $0x8] sm:$0x3] %v345
    // Predicated region
    $region26: #{tpu_custom_call.1} parent=1 // pred_check
      _
    $region27: #{tpu_custom_call.1} parent=1 // pred_check_branch
      %349 = sbr.rel (0) target = $region29
    $region28: #{tpu_custom_call.1} parent=1 // pred_region
      _
    $region29: #{tpu_custom_call.1} parent=1 // pred_fallthru
      _
    // Predicated region
    $region30: #{tpu_custom_call.1} parent=1 // pred_check
      _
    $region31: #{tpu_custom_call.1} parent=1 // pred_check_branch
      %351 = sbr.rel (0) target = $region33
    $region32: #{tpu_custom_call.1} parent=1 // pred_region
      _
    $region33: #{tpu_custom_call.1} parent=1 // pred_fallthru
      _
    %352 = vsyncpa [#allocation3], 1
    %353 = vsyncpa [#allocation5], 1

</llo_original>
